<compile_context>
chip_gen: v5e
topology: v5e:2x2
jax: 0.10.0
libtpu: 0.0.40
codegen_flags: <defaults>
</compile_context>

<pallas_src>
import functools
import math

import jax
import jax.numpy as jnp
from jax.experimental import pallas as pl
from jax.experimental.pallas import tpu as pltpu


def _round_up(x, m):
    return ((x + m - 1) // m) * m


# ----------------------------------------------------------------------------
# Fused MLP kernel: one row-tile per grid step, full weights resident in VMEM.
# ----------------------------------------------------------------------------
def _fused_mlp_kernel(x_ref, w1_ref, b1_ref, w2_ref, b2_ref, o_ref, *, use_relu):
    # Linear 1: bf16 x bf16 -> f32 accumulation on the MXU, + bias.
    h = jnp.dot(x_ref[...], w1_ref[...], preferred_element_type=jnp.float32)
    h = h + b1_ref[...]
    if use_relu:
        h = jnp.maximum(h, 0.0)
    # TODO(synk): nn.Dropout (dropout_r > 0) is identity in eval mode; omitted.
    # Linear 2: cast the hidden activations back to bf16 for the MXU.
    o = jnp.dot(h.astype(w2_ref.dtype), w2_ref[...],
                preferred_element_type=jnp.float32)
    o_ref[...] = (o + b2_ref[...]).astype(o_ref.dtype)


def mlp_forward(x, w1, b1, w2, b2, *, use_relu=True, compute_dtype=jnp.bfloat16):
    """Fused MLP: x @ w1 + b1 -> ReLU -> @ w2 + b2.

    x:  (..., in_size)
    w1: (in_size, mid_size), b1: (mid_size,)
    w2: (mid_size, out_size), b2: (out_size,)
    Returns (..., out_size) in float32.
    """
    orig_lead = x.shape[:-1]
    in_size = x.shape[-1]
    mid_size = w1.shape[1]
    out_size = w2.shape[1]

    x2 = x.reshape(-1, in_size)
    M = x2.shape[0]

    # Lane-dense padding: every feature dim -> multiple of 128.
    K = _round_up(in_size, 128)
    MID = _round_up(mid_size, 128)
    N = _round_up(out_size, 128)

    # Row tile: expose >= 2 parallel grid steps when possible (v7x has 2 TCs),
    # cap at 256 rows so double-buffered f32/bf16 tiles stay well under the
    # 64 MiB physical VMEM on v7x.
    tile_m = min(256, max(8, _round_up(-(-M // 2), 8)))
    M_pad = _round_up(max(M, tile_m), tile_m)

    # Zero-padding keeps the math exact: padded input columns multiply zero
    # weight rows, padded hidden/output columns carry zero weights and biases
    # (ReLU(0) = 0) and are sliced off below.
    xp = jnp.zeros((M_pad, K), compute_dtype).at[:M, :in_size].set(
        x2.astype(compute_dtype))
    w1p = jnp.zeros((K, MID), compute_dtype).at[:in_size, :mid_size].set(
        w1.astype(compute_dtype))
    b1p = jnp.zeros((1, MID), jnp.float32).at[0, :mid_size].set(
        b1.astype(jnp.float32))
    w2p = jnp.zeros((MID, N), compute_dtype).at[:mid_size, :out_size].set(
        w2.astype(compute_dtype))
    b2p = jnp.zeros((1, N), jnp.float32).at[0, :out_size].set(
        b2.astype(jnp.float32))

    grid = (M_pad // tile_m,)
    out = pl.pallas_call(
        functools.partial(_fused_mlp_kernel, use_relu=use_relu),
        out_shape=jax.ShapeDtypeStruct((M_pad, N), jnp.float32),
        grid=grid,
        in_specs=[
            pl.BlockSpec((tile_m, K), lambda i: (i, 0)),   # x tile (varies)
            pl.BlockSpec((K, MID), lambda i: (0, 0)),      # w1 (resident)
            pl.BlockSpec((1, MID), lambda i: (0, 0)),      # b1 (resident)
            pl.BlockSpec((MID, N), lambda i: (0, 0)),      # w2 (resident)
            pl.BlockSpec((1, N), lambda i: (0, 0)),        # b2 (resident)
        ],
        out_specs=pl.BlockSpec((tile_m, N), lambda i: (i, 0)),
        compiler_params=pltpu.CompilerParams(
            dimension_semantics=("parallel",),
            vmem_limit_bytes=32 * 1024 * 1024),
    )(xp, w1p, b1p, w2p, b2p)

    return out[:M, :out_size].reshape(*orig_lead, out_size)


# ----------------------------------------------------------------------------
# Pure-JAX reference (f32) for a sanity check.
# ----------------------------------------------------------------------------
def mlp_ref(x, w1, b1, w2, b2, use_relu=True):
    h = jnp.einsum("...i,ij->...j", x.astype(jnp.float32),
                   w1.astype(jnp.float32)) + b1
    if use_relu:
        h = jnp.maximum(h, 0.0)
    return jnp.einsum("...i,ij->...j", h, w2.astype(jnp.float32)) + b2


# ----------------------------------------------------------------------------
if __name__ == "__main__":
    key = jax.random.PRNGKey(0)
    kx, k1, k2, k3, k4 = jax.random.split(key, 5)

    B, S = 2, 8                 # batch, sequence
    IN, MID, OUT = 64, 128, 32  # MLP(in_size=64, mid_size=128, out_size=32)

    x = jax.random.normal(kx, (B, S, IN), dtype=jnp.float32)
    # Linear-layer-style init (scale ~ 1/sqrt(fan_in)).
    w1 = jax.random.normal(k1, (IN, MID), dtype=jnp.float32) / math.sqrt(IN)
    b1 = jax.random.normal(k2, (MID,), dtype=jnp.float32) * 0.01
    w2 = jax.random.normal(k3, (MID, OUT), dtype=jnp.float32) / math.sqrt(MID)
    b2 = jax.random.normal(k4, (OUT,), dtype=jnp.float32) * 0.01

    y = mlp_forward(x, w1, b1, w2, b2, use_relu=True)
    y = jax.block_until_ready(y)

    y_ref = jax.block_until_ready(mlp_ref(x, w1, b1, w2, b2))

    assert y.shape == (B, S, OUT), y.shape
    assert bool(jnp.all(jnp.isfinite(y)))
    # bf16 matmul inputs with f32 accumulation vs f32 reference -> loose tol.
    assert bool(jnp.allclose(y, y_ref, rtol=5e-2, atol=5e-2)), (
        float(jnp.max(jnp.abs(y - y_ref))))

    print("KERNEL_OK")
</pallas_src>

<mosaic_0001>
module attributes {stable_mosaic.version = 11 : i64} {
  func.func @_fused_mlp_kernel(%arg0: i32, %arg1: memref<8x128xbf16, #tpu.memory_space<vmem>>, %arg2: memref<128x128xbf16, #tpu.memory_space<vmem>>, %arg3: memref<1x128xf32, #tpu.memory_space<vmem>>, %arg4: memref<128x128xbf16, #tpu.memory_space<vmem>>, %arg5: memref<1x128xf32, #tpu.memory_space<vmem>>, %arg6: memref<8x128xf32, #tpu.memory_space<vmem>>) attributes {dimension_semantics = [#tpu.dimension_semantics<parallel>], iteration_bounds = array<i64: 2>, scalar_prefetch = 0 : i64, scratch_operands = 0 : i64, tpu.core_type = #tpu.core_type<tc>, window_params = [{transform_indices = @transform_0, window_bounds = array<i64: 8, 128>}, {pipeline_mode = #tpu.pipeline_mode<synchronous>, transform_indices = @transform_1, window_bounds = array<i64: 128, 128>}, {pipeline_mode = #tpu.pipeline_mode<synchronous>, transform_indices = @transform_2, window_bounds = array<i64: 1, 128>}, {pipeline_mode = #tpu.pipeline_mode<synchronous>, transform_indices = @transform_3, window_bounds = array<i64: 128, 128>}, {pipeline_mode = #tpu.pipeline_mode<synchronous>, transform_indices = @transform_4, window_bounds = array<i64: 1, 128>}, {transform_indices = @transform_5, window_bounds = array<i64: 8, 128>}]} {
    %c0 = arith.constant 0 : index
    %c0_0 = arith.constant 0 : index
    %0 = vector.load %arg1[%c0, %c0_0] : memref<8x128xbf16, #tpu.memory_space<vmem>>, vector<8x128xbf16>
    %c0_1 = arith.constant 0 : index
    %c0_2 = arith.constant 0 : index
    %1 = vector.load %arg2[%c0_1, %c0_2] : memref<128x128xbf16, #tpu.memory_space<vmem>>, vector<128x128xbf16>
    %cst = arith.constant dense<0.000000e+00> : vector<8x128xf32>
    %2 = tpu.matmul %0, %1, %cst {dimension_numbers = #tpu.dot_dimension_numbers<[1], [0], [0], [1], [0, 0, 1, 1], [], []>} : vector<8x128xbf16>, vector<128x128xbf16>, vector<8x128xf32> -> vector<8x128xf32>
    %c0_3 = arith.constant 0 : index
    %c0_4 = arith.constant 0 : index
    %3 = vector.load %arg3[%c0_3, %c0_4] : memref<1x128xf32, #tpu.memory_space<vmem>>, vector<1x128xf32>
    %4 = vector.broadcast %3 : vector<1x128xf32> to vector<8x128xf32>
    %5 = arith.addf %2, %4 : vector<8x128xf32>
    %cst_5 = arith.constant 0.000000e+00 : f32
    %6 = vector.broadcast %cst_5 : f32 to vector<8x128xf32>
    %7 = arith.maximumf %5, %6 : vector<8x128xf32>
    %8 = arith.truncf %7 : vector<8x128xf32> to vector<8x128xbf16>
    %c0_6 = arith.constant 0 : index
    %c0_7 = arith.constant 0 : index
    %9 = vector.load %arg4[%c0_6, %c0_7] : memref<128x128xbf16, #tpu.memory_space<vmem>>, vector<128x128xbf16>
    %cst_8 = arith.constant dense<0.000000e+00> : vector<8x128xf32>
    %10 = tpu.matmul %8, %9, %cst_8 {dimension_numbers = #tpu.dot_dimension_numbers<[1], [0], [0], [1], [0, 0, 1, 1], [], []>} : vector<8x128xbf16>, vector<128x128xbf16>, vector<8x128xf32> -> vector<8x128xf32>
    %c0_9 = arith.constant 0 : index
    %c0_10 = arith.constant 0 : index
    %11 = vector.load %arg5[%c0_9, %c0_10] : memref<1x128xf32, #tpu.memory_space<vmem>>, vector<1x128xf32>
    %12 = vector.broadcast %11 : vector<1x128xf32> to vector<8x128xf32>
    %13 = arith.addf %10, %12 : vector<8x128xf32>
    %c0_11 = arith.constant 0 : index
    %c0_12 = arith.constant 0 : index
    %14 = vector.load %arg6[%c0_11, %c0_12] : memref<8x128xf32, #tpu.memory_space<vmem>>, vector<8x128xf32>
    tpu.vector_store %arg6[%c0_11, %c0_12], %13 {strides = array<i32>} : memref<8x128xf32, #tpu.memory_space<vmem>>, vector<8x128xf32>,
    return
  }
  func.func @transform_0(%arg0: i32) -> (i32, i32) {
    %c0_i32 = arith.constant 0 : i32
    %c0_i32_0 = arith.constant 0 : i32
    return %arg0, %c0_i32 : i32, i32
  }
  func.func @transform_1(%arg0: i32) -> (i32, i32) {
    %c0_i32 = arith.constant 0 : i32
    %c0_i32_0 = arith.constant 0 : i32
    %c0_i32_1 = arith.constant 0 : i32
    return %c0_i32, %c0_i32_0 : i32, i32
  }
  func.func @transform_2(%arg0: i32) -> (i32, i32) {
    %c0_i32 = arith.constant 0 : i32
    %c0_i32_0 = arith.constant 0 : i32
    %c0_i32_1 = arith.constant 0 : i32
    return %c0_i32, %c0_i32_0 : i32, i32
  }
  func.func @transform_3(%arg0: i32) -> (i32, i32) {
    %c0_i32 = arith.constant 0 : i32
    %c0_i32_0 = arith.constant 0 : i32
    %c0_i32_1 = arith.constant 0 : i32
    return %c0_i32, %c0_i32_0 : i32, i32
  }
  func.func @transform_4(%arg0: i32) -> (i32, i32) {
    %c0_i32 = arith.constant 0 : i32
    %c0_i32_0 = arith.constant 0 : i32
    %c0_i32_1 = arith.constant 0 : i32
    return %c0_i32, %c0_i32_0 : i32, i32
  }
  func.func @transform_5(%arg0: i32) -> (i32, i32) {
    %c0_i32 = arith.constant 0 : i32
    %c0_i32_0 = arith.constant 0 : i32
    return %arg0, %c0_i32 : i32, i32
  }
}

</mosaic_0001>

<llo_original>
// kernel: tpu_custom_call.1
$region0: #{tpu_custom_call.1}
  #allocation0 [shape = 'u32[]', space=smem, size = 0x4, offset = 0x4, fixed_abs, tag = 'smem constant byte address 0x4 - core index']
  #allocation1 [shape = 'u32[72,128]{1,0:T(1,128)}', space=vmem, size = 0x9000, scoped, tag = 'internal scratch']
  %s0 = inlined_call_operand.hbm [shape: bf16[16,128], index: 0, kind: input, shape index: {}]
  %s1 = inlined_call_operand.hbm [shape: bf16[128,128], index: 1, kind: input, shape index: {}]
  %s2 = inlined_call_operand.vmem [shape: f32[1,128], index: 2, kind: input, shape index: {}]
  %s3 = inlined_call_operand.hbm [shape: bf16[128,128], index: 3, kind: input, shape index: {}]
  %s4 = inlined_call_operand.vmem [shape: f32[1,128], index: 4, kind: input, shape index: {}]
  %s5 = inlined_call_operand.hbm [shape: f32[16,128], index: 5, kind: output, shape index: {}]
  %s6 = sld [smem:[#allocation0]]
  $region65: #{tpu_custom_call.1} parent=0
    _
  %s8 = ssub.s32 1, %s6
  %s9 = scalar_select 0, %s8, %s6
  $region1: #{tpu_custom_call.1} parent=0
    #allocation2 [shape = 'u8[4096]{0}', space=vmem, size = 0x1000, scoped, tag = 'input window, operand 0']
    #allocation3 [shape = 's32[2]{0}', space=sflag, size = 0x8, scoped, tag = 'scoped memory for tpu_custom_call.1']
    #allocation4 [shape = 's32[2]{0}', space=sflag, size = 0x8, scoped, tag = 'scoped memory for tpu_custom_call.1']
    #allocation5 [shape = 'u8[32768]{0}', space=vmem, size = 0x8000, scoped, tag = 'input window, operand 1, single buffered']
    #allocation6 [shape = 's32[1]{0}', space=sflag, size = 0x4, scoped, tag = 'scoped memory for tpu_custom_call.1']
    #allocation7 [shape = 'u8[32768]{0}', space=vmem, size = 0x8000, scoped, tag = 'input window, operand 3, single buffered']
    #allocation8 [shape = 'u8[8192]{0}', space=vmem, size = 0x2000, scoped, tag = 'output window, operand 0']
    %10 = vsyncpa [#allocation3], 0
    %s11 = scalar_lea.sflag [#allocation3], 1
    %12 = vsyncpa %s11, 0
    %13 = vsyncpa [#allocation6], 0
    %14 = vsyncpa [#allocation4], 0
    %s15 = scalar_lea.sflag [#allocation4], 1
    %16 = vsyncpa %s15, 0
    loop: start=0, step=1, limit=4
    $region2: #{tpu_custom_call.1} parent=1 // loop_pre_header
      _
    $region3: #{tpu_custom_call.1} parent=1 // loop_header
      %s18 = sphi 0, %s22
      %p19 = scmp.ge.s32.totalorder %s18, 4
      %s28 = sphi 0, %s30
      %s31 = sphi 0, %s28
      %s32 = sphi 0, %s31
      %s48 = sphi 0, %s32
      %s52 = sphi 0, %s52
      %s54 = sphi 0, %s52
      %s55 = sphi 0, %s54
      %s69 = sphi 0, %s55
      %s73 = sphi 0, %s73
      %s75 = sphi 0, %s73
      %s76 = sphi 0, %s75
      %s90 = sphi 0, %s76
      %s94 = sphi 0, %s94
      %s96 = sphi 0, %s94
      %s97 = sphi 0, %s96
      %s111 = sphi 0, %s97
      %s115 = sphi 0, %s115
      %s117 = sphi 0, %s115
      %s118 = sphi 0, %s117
      %s132 = sphi 0, %s118
      %s138 = sphi 0, %s140
      %s141 = sphi 0, %s138
      %s142 = sphi 0, %s141
      %s158 = sphi 0, %s142
    $region4: #{tpu_custom_call.1} parent=1 // loop_header_branch
      %21 = sbr.rel (%p19) target = $region8
    $region5: #{tpu_custom_call.1} parent=1 // loop_body
      %s23 = ssub.s32 %s18, 1
      %s24 = ssub.s32 %s18, 2
      %s25 = sadd.s32 %s18, 1
      %s26 = ssub.s32 %s18, %s25
      %p27 = scmp.eq.s32.totalorder %s26, 0
      %s29 = sadd.s32 %s28, 1
      %s30 = scalar_select %p27, %s28, %s29
      %p33 = pneg %p27
      %p34 = scmp.eq.s32.totalorder %s18, 1
      %p35 = por %p33, %p34
      %p36 = scmp.ne.s32.totalorder %s28, %s31
      %p37 = scmp.eq.s32.totalorder %s18, 0
      %p38 = por %p36, %p37
      %p39 = scmp.ne.s32.totalorder %s28, %s31
      %p40 = scmp.eq.s32.totalorder %s23, 1
      %p41 = por %p39, %p40
      %p42 = scmp.ne.s32.totalorder %s31, %s32
      %p43 = scmp.eq.s32.totalorder %s23, 0
      %p44 = por %p42, %p43
      %p45 = scmp.ne.s32.totalorder %s31, %s32
      %p46 = scmp.eq.s32.totalorder %s24, 1
      %p47 = por %p45, %p46
      %p49 = scmp.ne.s32.totalorder %s32, %s48
      %p50 = scmp.eq.s32.totalorder %s24, 0
      %p51 = por %p49, %p50
      %s53 = sadd.s32 %s52, 1
      %p56 = scmp.eq.s32.totalorder %s18, 1
      %p57 = scmp.ne.s32.totalorder %s52, %s54
      %p58 = scmp.eq.s32.totalorder %s18, 0
      %p59 = por %p57, %p58
      %p60 = scmp.ne.s32.totalorder %s52, %s54
      %p61 = scmp.eq.s32.totalorder %s23, 1
      %p62 = por %p60, %p61
      %p63 = scmp.ne.s32.totalorder %s54, %s55
      %p64 = scmp.eq.s32.totalorder %s23, 0
      %p65 = por %p63, %p64
      %p66 = scmp.ne.s32.totalorder %s54, %s55
      %p67 = scmp.eq.s32.totalorder %s24, 1
      %p68 = por %p66, %p67
      %p70 = scmp.ne.s32.totalorder %s55, %s69
      %p71 = scmp.eq.s32.totalorder %s24, 0
      %p72 = por %p70, %p71
      %s74 = sadd.s32 %s73, 1
      %p77 = scmp.eq.s32.totalorder %s18, 1
      %p78 = scmp.ne.s32.totalorder %s73, %s75
      %p79 = scmp.eq.s32.totalorder %s18, 0
      %p80 = por %p78, %p79
      %p81 = scmp.ne.s32.totalorder %s73, %s75
      %p82 = scmp.eq.s32.totalorder %s23, 1
      %p83 = por %p81, %p82
      %p84 = scmp.ne.s32.totalorder %s75, %s76
      %p85 = scmp.eq.s32.totalorder %s23, 0
      %p86 = por %p84, %p85
      %p87 = scmp.ne.s32.totalorder %s75, %s76
      %p88 = scmp.eq.s32.totalorder %s24, 1
      %p89 = por %p87, %p88
      %p91 = scmp.ne.s32.totalorder %s76, %s90
      %p92 = scmp.eq.s32.totalorder %s24, 0
      %p93 = por %p91, %p92
      %s95 = sadd.s32 %s94, 1
      %p98 = scmp.eq.s32.totalorder %s18, 1
      %p99 = scmp.ne.s32.totalorder %s94, %s96
      %p100 = scmp.eq.s32.totalorder %s18, 0
      %p101 = por %p99, %p100
      %p102 = scmp.ne.s32.totalorder %s94, %s96
      %p103 = scmp.eq.s32.totalorder %s23, 1
      %p104 = por %p102, %p103
      %p105 = scmp.ne.s32.totalorder %s96, %s97
      %p106 = scmp.eq.s32.totalorder %s23, 0
      %p107 = por %p105, %p106
      %p108 = scmp.ne.s32.totalorder %s96, %s97
      %p109 = scmp.eq.s32.totalorder %s24, 1
      %p110 = por %p108, %p109
      %p112 = scmp.ne.s32.totalorder %s97, %s111
      %p113 = scmp.eq.s32.totalorder %s24, 0
      %p114 = por %p112, %p113
      %s116 = sadd.s32 %s115, 1
      %p119 = scmp.eq.s32.totalorder %s18, 1
      %p120 = scmp.ne.s32.totalorder %s115, %s117
      %p121 = scmp.eq.s32.totalorder %s18, 0
      %p122 = por %p120, %p121
      %p123 = scmp.ne.s32.totalorder %s115, %s117
      %p124 = scmp.eq.s32.totalorder %s23, 1
      %p125 = por %p123, %p124
      %p126 = scmp.ne.s32.totalorder %s117, %s118
      %p127 = scmp.eq.s32.totalorder %s23, 0
      %p128 = por %p126, %p127
      %p129 = scmp.ne.s32.totalorder %s117, %s118
      %p130 = scmp.eq.s32.totalorder %s24, 1
      %p131 = por %p129, %p130
      %p133 = scmp.ne.s32.totalorder %s118, %s132
      %p134 = scmp.eq.s32.totalorder %s24, 0
      %p135 = por %p133, %p134
      %s136 = ssub.s32 %s18, %s25
      %p137 = scmp.eq.s32.totalorder %s136, 0
      %s139 = sadd.s32 %s138, 1
      %s140 = scalar_select %p137, %s138, %s139
      %p143 = pneg %p137
      %p144 = scmp.eq.s32.totalorder %s18, 1
      %p145 = por %p143, %p144
      %p146 = scmp.ne.s32.totalorder %s138, %s141
      %p147 = scmp.eq.s32.totalorder %s18, 0
      %p148 = por %p146, %p147
      %p149 = scmp.ne.s32.totalorder %s138, %s141
      %p150 = scmp.eq.s32.totalorder %s23, 1
      %p151 = por %p149, %p150
      %p152 = scmp.ne.s32.totalorder %s141, %s142
      %p153 = scmp.eq.s32.totalorder %s23, 0
      %p154 = por %p152, %p153
      %p155 = scmp.ne.s32.totalorder %s141, %s142
      %p156 = scmp.eq.s32.totalorder %s24, 1
      %p157 = por %p155, %p156
      %p159 = scmp.ne.s32.totalorder %s142, %s158
      %p160 = scmp.eq.s32.totalorder %s24, 0
      %p161 = por %p159, %p160
      %p162 = scmp.le.s32.totalorder 1, %s18
      %p163 = scmp.lt.s32.totalorder %s18, 3
      %p164 = pnand %p162, %p163
      %p165 = pneg %p164
      // Predicated region
      $region9: #{tpu_custom_call.1} parent=5 // pred_check
        _
      $region10: #{tpu_custom_call.1} parent=5 // pred_check_branch
        %167 = sbr.rel (%p164) target = $region12
      $region11: #{tpu_custom_call.1} parent=5 // pred_region
        %s168 = ssub.s32 %s18, 1
        // Predicated region
        $region13: #{tpu_custom_call.1} parent=11 // pred_check
          %p169 = pneg %p65
        $region14: #{tpu_custom_call.1} parent=11 // pred_check_branch
          %171 = sbr.rel (%p169) target = $region16
        $region15: #{tpu_custom_call.1} parent=11 // pred_region
          %173 = vsyncadd [#allocation6], 0
          %s174 = sshll.u32 %s1, 4
          %s175 = int_to_ptr.hbm [resolvable:$true] %s174
          %s176 = sshll.u32 [#allocation5], 4
          %s177 = int_to_ptr.vmem [resolvable:$true] %s176
          %182 = dma.hbm_to_vmem [thread:$0]  %s175, 1024, %s177, [#allocation6], 64, 64, 4
        $region16: #{tpu_custom_call.1} parent=11 // pred_fallthru
          _
        // Predicated region
        $region17: #{tpu_custom_call.1} parent=11 // pred_check
          %p183 = pneg %p86
        $region18: #{tpu_custom_call.1} parent=11 // pred_check_branch
          %185 = sbr.rel (%p183) target = $region20
        $region19: #{tpu_custom_call.1} parent=11 // pred_region
          _
        $region20: #{tpu_custom_call.1} parent=11 // pred_fallthru
          _
        // Predicated region
        $region21: #{tpu_custom_call.1} parent=11 // pred_check
          %p186 = pneg %p107
        $region22: #{tpu_custom_call.1} parent=11 // pred_check_branch
          %188 = sbr.rel (%p186) target = $region24
        $region23: #{tpu_custom_call.1} parent=11 // pred_region
          %190 = vsyncadd [#allocation6], 0
          %s191 = sshll.u32 %s3, 4
          %s192 = int_to_ptr.hbm [resolvable:$true] %s191
          %s193 = sshll.u32 [#allocation7], 4
          %s194 = int_to_ptr.vmem [resolvable:$true] %s193
          %199 = dma.hbm_to_vmem [thread:$0]  %s192, 1024, %s194, [#allocation6], 64, 64, 4
        $region24: #{tpu_custom_call.1} parent=11 // pred_fallthru
          _
        // Predicated region
        $region25: #{tpu_custom_call.1} parent=11 // pred_check
          %p200 = pneg %p128
        $region26: #{tpu_custom_call.1} parent=11 // pred_check_branch
          %202 = sbr.rel (%p200) target = $region28
        $region27: #{tpu_custom_call.1} parent=11 // pred_region
          _
        $region28: #{tpu_custom_call.1} parent=11 // pred_fallthru
          _
      $region12: #{tpu_custom_call.1} parent=5 // pred_fallthru
        _
      %p203 = scmp.lt.s32.totalorder %s18, 2
      // Predicated region
      $region29: #{tpu_custom_call.1} parent=5 // pred_check
        %p204 = pneg %p203
      $region30: #{tpu_custom_call.1} parent=5 // pred_check_branch
        %206 = sbr.rel (%p204) target = $region32
      $region31: #{tpu_custom_call.1} parent=5 // pred_region
        // Predicated region
        $region33: #{tpu_custom_call.1} parent=31 // pred_check
          %p207 = pneg %p38
        $region34: #{tpu_custom_call.1} parent=31 // pred_check_branch
          %209 = sbr.rel (%p207) target = $region36
        $region35: #{tpu_custom_call.1} parent=31 // pred_region
          %s210 = sand.u32 %s28, 1
          %s211 = scalar_lea.sflag [#allocation3], %s210
          %s212 = sand.u32 %s28, 1
          %s213 = smul.addr %s212, 4
          %s214 = scalar_lea.vmem [#allocation2], %s213
          %216 = vsyncadd %s211, 0
          %s217 = smul.addr %s18, 4
          %s218 = scalar_lea.hbm %s0, %s217
          %s220 = sshll.u32 %s218, 4
          %s221 = int_to_ptr.hbm [resolvable:$true] %s220
          %s222 = sshll.u32 %s214, 4
          %s223 = int_to_ptr.vmem [resolvable:$true] %s222
          %225 = dma.hbm_to_vmem [thread:$0]  %s221, 64, %s223, %s211
        $region36: #{tpu_custom_call.1} parent=31 // pred_fallthru
          _
      $region32: #{tpu_custom_call.1} parent=5 // pred_fallthru
        _
      %p226 = scmp.le.s32.totalorder 1, %s18
      %p227 = scmp.lt.s32.totalorder %s18, 3
      %p228 = pnand %p226, %p227
      %p229 = pneg %p228
      // Predicated region
      $region37: #{tpu_custom_call.1} parent=5 // pred_check
        _
      $region38: #{tpu_custom_call.1} parent=5 // pred_check_branch
        %231 = sbr.rel (%p228) target = $region40
      $region39: #{tpu_custom_call.1} parent=5 // pred_region
        %s232 = ssub.s32 %s18, 1
        %s233 = sand.u32 %s31, 1
        %s234 = scalar_lea.sflag [#allocation3], %s233
        %s235 = sand.u32 %s31, 1
        %s236 = smul.addr %s235, 4
        %s237 = scalar_lea.vmem [#allocation2], %s236
        // Predicated region
        $region41: #{tpu_custom_call.1} parent=39 // pred_check
          %p238 = pneg %p44
        $region42: #{tpu_custom_call.1} parent=39 // pred_check_branch
          %240 = sbr.rel (%p238) target = $region44
        $region43: #{tpu_custom_call.1} parent=39 // pred_region
          %242 = dma.done %s234, 64
        $region44: #{tpu_custom_call.1} parent=39 // pred_fallthru
          _
        // Predicated region
        $region45: #{tpu_custom_call.1} parent=39 // pred_check
          %p243 = pneg %p65
        $region46: #{tpu_custom_call.1} parent=39 // pred_check_branch
          %245 = sbr.rel (%p243) target = $region48
        $region47: #{tpu_custom_call.1} parent=39 // pred_region
          %247 = dma.done [#allocation6], 1024
        $region48: #{tpu_custom_call.1} parent=39 // pred_fallthru
          _
        // Predicated region
        $region49: #{tpu_custom_call.1} parent=39 // pred_check
          %p248 = pneg %p107
        $region50: #{tpu_custom_call.1} parent=39 // pred_check_branch
          %250 = sbr.rel (%p248) target = $region52
        $region51: #{tpu_custom_call.1} parent=39 // pred_region
          %252 = dma.done [#allocation6], 1024
        $region52: #{tpu_custom_call.1} parent=39 // pred_fallthru
          _
        %s253 = sand.u32 %s31, 1
        %s254 = scalar_lea.sflag [#allocation3], %s253
        %s255 = sand.u32 %s31, 1
        %s256 = smul.addr %s255, 4
        %s257 = scalar_lea.vmem [#allocation2], %s256
        %p258 = pneg %p44
        %p259 = pneg %p41
        %p260 = pneg %p65
        %p261 = pneg %p62
        %p262 = pneg %p86
        %p263 = pneg %p83
        %p264 = pneg %p107
        %p265 = pneg %p104
        %p266 = pneg %p128
        %p267 = pneg %p125
        %p268 = pneg %p154
        %p269 = pneg %p151
        %s270 = sand.u32 %s141, 1
        %s271 = scalar_lea.sflag [#allocation4], %s270
        %s272 = sand.u32 %s141, 1
        %s273 = smul.addr %s272, 8
        %s274 = scalar_lea.vmem [#allocation8], %s273
        %v275 = vld [vmem:[%s237] sm:$0xf]
        %v276 = vld [vmem:[#allocation5] sm:$0xf]
        %v277 = vld [vmem:[#allocation5 + $0x4] sm:$0xf]
        %v278 = vld [vmem:[#allocation5 + $0x8] sm:$0xf]
        %v279 = vld [vmem:[#allocation5 + $0xc] sm:$0xf]
        %v280 = vld [vmem:[#allocation5 + $0x10] sm:$0xf]
        %v281 = vld [vmem:[#allocation5 + $0x14] sm:$0xf]
        %v282 = vld [vmem:[#allocation5 + $0x18] sm:$0xf]
        %v283 = vld [vmem:[#allocation5 + $0x1c] sm:$0xf]
        %v284 = vld [vmem:[#allocation5 + $0x20] sm:$0xf]
        %v285 = vld [vmem:[#allocation5 + $0x24] sm:$0xf]
        %v286 = vld [vmem:[#allocation5 + $0x28] sm:$0xf]
        %v287 = vld [vmem:[#allocation5 + $0x2c] sm:$0xf]
        %v288 = vld [vmem:[#allocation5 + $0x30] sm:$0xf]
        %v289 = vld [vmem:[#allocation5 + $0x34] sm:$0xf]
        %v290 = vld [vmem:[#allocation5 + $0x38] sm:$0xf]
        %v291 = vld [vmem:[#allocation5 + $0x3c] sm:$0xf]
        %v292 = vld [vmem:[%s2] sm:$0x1]
        %v294 = vperm.slane %v292, 0
        %v312 = vunpack.c.l.b16 %v276
        %v313 = vunpack.c.l.b16 %v277
        %v314 = vunpack.c.l.b16 %v278
        %v315 = vunpack.c.l.b16 %v279
        %v316 = vunpack.c.l.b16 %v280
        %v317 = vunpack.c.l.b16 %v281
        %v318 = vunpack.c.l.b16 %v282
        %v319 = vunpack.c.l.b16 %v283
        %v320 = vunpack.c.l.b16 %v284
        %v321 = vunpack.c.l.b16 %v285
        %v322 = vunpack.c.l.b16 %v286
        %v323 = vunpack.c.l.b16 %v287
        %v324 = vunpack.c.l.b16 %v288
        %v325 = vunpack.c.l.b16 %v289
        %v326 = vunpack.c.l.b16 %v290
        %v327 = vunpack.c.l.b16 %v291
        %v328 = vpack.c.b16 %v313, %v312
        %v329 = vpack.c.b16 %v315, %v314
        %v330 = vpack.c.b16 %v317, %v316
        %v331 = vpack.c.b16 %v319, %v318
        %v332 = vpack.c.b16 %v321, %v320
        %v333 = vpack.c.b16 %v323, %v322
        %v334 = vpack.c.b16 %v325, %v324
        %v335 = vpack.c.b16 %v327, %v326
        %344 = vmatpush.bf16.msra.mxu0 %v335
        %345 = vmatpush.bf16.msra.mxu0 %v334
        %346 = vmatpush.bf16.msra.mxu0 %v333
        %347 = vmatpush.bf16.msra.mxu0 %v332
        %348 = vmatpush.bf16.msra.mxu0 %v331
        %349 = vmatpush.bf16.msra.mxu0 %v330
        %350 = vmatpush.bf16.msra.mxu0 %v329
        %351 = vmatpush.bf16.msra.mxu0 %v328
        %352 = vmatmul.bf16.gmra.mxu0 %v275
        %v353 = vpop.f32.mrf.mxu0
        %v354 = vadd.f32 %v294, %v353
        %v355 = vpop.f32.mrf.mxu0
        %356 = vdwg.mxu0
        %v357 = vmax.f32 %v354, 0.0
        %v358 = vpack.c.bf16 %v357, %v357
        %v359 = vld [vmem:[#allocation7] sm:$0xf]
        %v360 = vld [vmem:[#allocation7 + $0x4] sm:$0xf]
        %v361 = vld [vmem:[#allocation7 + $0x8] sm:$0xf]
        %v362 = vld [vmem:[#allocation7 + $0xc] sm:$0xf]
        %v363 = vld [vmem:[#allocation7 + $0x10] sm:$0xf]
        %v364 = vld [vmem:[#allocation7 + $0x14] sm:$0xf]
        %v365 = vld [vmem:[#allocation7 + $0x18] sm:$0xf]
        %v366 = vld [vmem:[#allocation7 + $0x1c] sm:$0xf]
        %v367 = vld [vmem:[#allocation7 + $0x20] sm:$0xf]
        %v368 = vld [vmem:[#allocation7 + $0x24] sm:$0xf]
        %v369 = vld [vmem:[#allocation7 + $0x28] sm:$0xf]
        %v370 = vld [vmem:[#allocation7 + $0x2c] sm:$0xf]
        %v371 = vld [vmem:[#allocation7 + $0x30] sm:$0xf]
        %v372 = vld [vmem:[#allocation7 + $0x34] sm:$0xf]
        %v373 = vld [vmem:[#allocation7 + $0x38] sm:$0xf]
        %v374 = vld [vmem:[#allocation7 + $0x3c] sm:$0xf]
        %v375 = vld [vmem:[%s4] sm:$0x1]
        %v377 = vperm.slane %v375, 0
        %v395 = vunpack.c.l.b16 %v359
        %v396 = vunpack.c.l.b16 %v360
        %v397 = vunpack.c.l.b16 %v361
        %v398 = vunpack.c.l.b16 %v362
        %v399 = vunpack.c.l.b16 %v363
        %v400 = vunpack.c.l.b16 %v364
        %v401 = vunpack.c.l.b16 %v365
        %v402 = vunpack.c.l.b16 %v366
        %v403 = vunpack.c.l.b16 %v367
        %v404 = vunpack.c.l.b16 %v368
        %v405 = vunpack.c.l.b16 %v369
        %v406 = vunpack.c.l.b16 %v370
        %v407 = vunpack.c.l.b16 %v371
        %v408 = vunpack.c.l.b16 %v372
        %v409 = vunpack.c.l.b16 %v373
        %v410 = vunpack.c.l.b16 %v374
        %v411 = vpack.c.b16 %v396, %v395
        %v412 = vpack.c.b16 %v398, %v397
        %v413 = vpack.c.b16 %v400, %v399
        %v414 = vpack.c.b16 %v402, %v401
        %v415 = vpack.c.b16 %v404, %v403
        %v416 = vpack.c.b16 %v406, %v405
        %v417 = vpack.c.b16 %v408, %v407
        %v418 = vpack.c.b16 %v410, %v409
        %427 = vmatpush.bf16.msra.mxu0 %v418
        %428 = vmatpush.bf16.msra.mxu0 %v417
        %429 = vmatpush.bf16.msra.mxu0 %v416
        %430 = vmatpush.bf16.msra.mxu0 %v415
        %431 = vmatpush.bf16.msra.mxu0 %v414
        %432 = vmatpush.bf16.msra.mxu0 %v413
        %433 = vmatpush.bf16.msra.mxu0 %v412
        %434 = vmatpush.bf16.msra.mxu0 %v411
        %435 = vmatmul.bf16.gmra.mxu0 %v358
        %v436 = vpop.f32.mrf.mxu0
        %v437 = vadd.f32 %v377, %v436
        %v438 = vpop.f32.mrf.mxu0
        %439 = vdwg.mxu0
        %440 = vst [vmem:[%s274] sm:$0xff] %v437
        %s441 = sand.u32 %s141, 1
        %s442 = scalar_lea.sflag [#allocation4], %s441
        %s443 = sand.u32 %s141, 1
        %s444 = smul.addr %s443, 8
        %s445 = scalar_lea.vmem [#allocation8], %s444
        // Predicated region
        $region53: #{tpu_custom_call.1} parent=39 // pred_check
          %p446 = pneg %p151
        $region54: #{tpu_custom_call.1} parent=39 // pred_check_branch
          %448 = sbr.rel (%p446) target = $region56
        $region55: #{tpu_custom_call.1} parent=39 // pred_region
          %450 = vsyncadd %s442, 0
          %s451 = smul.addr %s23, 8
          %s452 = scalar_lea.hbm %s5, %s451
          %s454 = sshll.u32 %s445, 4
          %s455 = int_to_ptr.vmem [resolvable:$true] %s454
          %s456 = sshll.u32 %s452, 4
          %s457 = int_to_ptr.hbm [resolvable:$true] %s456
          %459 = dma.vmem_to_hbm [thread:$0]  %s455, 128, %s457, %s442
        $region56: #{tpu_custom_call.1} parent=39 // pred_fallthru
          _
      $region40: #{tpu_custom_call.1} parent=5 // pred_fallthru
        _
      %p460 = scmp.le.s32.totalorder 2, %s18
      // Predicated region
      $region57: #{tpu_custom_call.1} parent=5 // pred_check
        %p461 = pneg %p460
      $region58: #{tpu_custom_call.1} parent=5 // pred_check_branch
        %463 = sbr.rel (%p461) target = $region60
      $region59: #{tpu_custom_call.1} parent=5 // pred_region
        %s464 = ssub.s32 %s18, 2
        // Predicated region
        $region61: #{tpu_custom_call.1} parent=59 // pred_check
          %p465 = pneg %p157
        $region62: #{tpu_custom_call.1} parent=59 // pred_check_branch
          %467 = sbr.rel (%p465) target = $region64
        $region63: #{tpu_custom_call.1} parent=59 // pred_region
          %s468 = sand.u32 %s142, 1
          %s469 = scalar_lea.sflag [#allocation4], %s468
          %s470 = sand.u32 %s142, 1
          %s471 = smul.addr %s470, 8
          %s472 = scalar_lea.vmem [#allocation8], %s471
          %474 = dma.done %s469, 128
        $region64: #{tpu_custom_call.1} parent=59 // pred_fallthru
          _
      $region60: #{tpu_custom_call.1} parent=5 // pred_fallthru
        _
    $region6: #{tpu_custom_call.1} parent=1 // loop_footer
      %s22 = sadd.s32 1, %s18
    $region7: #{tpu_custom_call.1} parent=1 // loop_footer_branch
      %17 = sbr.rel target = $region3
    $region8: #{tpu_custom_call.1} parent=1 // loop_exit
      _
    %475 = vsyncpa [#allocation3], 1
    %s476 = scalar_lea.sflag [#allocation3], 1
    %477 = vsyncpa %s476, 1
    %478 = vsyncpa [#allocation6], 1
    %479 = vsyncpa [#allocation4], 1
    %s480 = scalar_lea.sflag [#allocation4], 1
    %481 = vsyncpa %s480, 1

</llo_original>
